<compile_context>
chip_gen: v6e
topology: v6e:2x2x1
jax: 0.10.0
libtpu: 0.0.40
codegen_flags: <defaults>
</compile_context>

<pallas_src>
import functools

import jax
import jax.numpy as jnp
from jax.experimental import pallas as pl
from jax.experimental.pallas import tpu as pltpu


def _round_up(x, m):
    return ((x + m - 1) // m) * m


def _largest_divisor_leq(n, cap, step=1):
    """Largest multiple-of-`step` divisor of n that is <= cap (0 if none)."""
    best = 0
    for d in range(step, max(cap, 0) + 1, step):
        if n % d == 0:
            best = d
    return best


def _choose_tiles(B, P, max_rows):
    """Pick (tile_b, tile_p) with tile_b | B and tile_b*tile_p <= max_rows."""
    if P > max_rows:
        # Patch axis must be tiled; batch tile stays 1.
        tile_p = _largest_divisor_leq(P, max_rows, step=8)
        if tile_p == 0:
            tile_p = max(8, (max_rows // 8) * 8)   # ragged last tile (masked)
        return 1, tile_p
    # Whole image fits in one step: pack several images per step.
    cap_b = max(1, max_rows // P)
    tile_b = _largest_divisor_leq(B, min(cap_b, B), step=1) or 1
    # Keep >= 2 batch tiles for v7x megacore when the split tiles stay big.
    if tile_b == B and B >= 2 and (B // 2) * P >= 128:
        half = _largest_divisor_leq(B, B // 2, step=1)
        if half:
            tile_b = half
    return tile_b, P


# ----------------------------------------------------------------------------
# Pallas kernel
# ----------------------------------------------------------------------------
def _qpnet_kernel(num_layers, total_p, inv_p, *refs):
    """refs = (x, w0t, b0, [wit, bi]*L, w_fused, b_fused, out, acc)."""
    x_ref = refs[0]
    out_ref = refs[-2]
    acc_ref = refs[-1]
    wrefs = refs[1:-2]

    pi = pl.program_id(1)
    tile_b, tile_p, kpad = x_ref.shape

    @pl.when(pi == 0)
    def _init():
        acc_ref[...] = jnp.zeros_like(acc_ref)

    # Patch conv (4x4 stride 4) == matmul over flattened patch features.
    x = x_ref[...].reshape(tile_b * tile_p, kpad)        # (rows, Kpad)

    i = 0
    w0t = wrefs[i][...]                                  # (Kpad, Cpad)
    b0 = wrefs[i + 1][...]                               # (1, Cpad) f32
    i += 2
    feat = jnp.dot(x, w0t, preferred_element_type=jnp.float32) + b0
    feat = jnp.maximum(feat, 0.0)                        # bias/ReLU in f32

    # num_layers x (1x1 conv + ReLU) == matmuls over channels.
    for _ in range(num_layers):
        wt = wrefs[i][...]                               # (Cpad, Cpad)
        b = wrefs[i + 1][...]                            # (1, Cpad) f32
        i += 2
        feat = jnp.dot(feat.astype(wt.dtype), wt,
                       preferred_element_type=jnp.float32) + b
        feat = jnp.maximum(feat, 0.0)

    # Global average pool (fused path_q + lastOut_q handled in finalize):
    # accumulate per-image row sums of feat.
    cpad = feat.shape[-1]
    feat = feat.reshape(tile_b, tile_p, cpad)
    if total_p % tile_p != 0:
        # Ragged last patch tile: zero the out-of-range rows before summing.
        row = pi * tile_p + jax.lax.broadcasted_iota(
            jnp.int32, (tile_b, tile_p, 1), 1)
        feat = jnp.where(row < total_p, feat, 0.0)
    acc_ref[...] += jnp.sum(feat, axis=1)                # (tile_b, Cpad)

    @pl.when(pi == pl.num_programs(1) - 1)
    def _finalize():
        w_fused = wrefs[i][...]                          # (Cpad, Opad) f32
        b_fused = wrefs[i + 1][...]                      # (1, Opad) f32
        pooled = acc_ref[...] * inv_p                    # (tile_b, Cpad) f32
        res = jnp.dot(pooled, w_fused,
                      preferred_element_type=jnp.float32) + b_fused
        out_ref[...] = res.reshape(out_ref.shape)        # (tile_b, 1, Opad)


# ----------------------------------------------------------------------------
# Wrapper
# ----------------------------------------------------------------------------
def qpnet_forward_pallas(x_nchw, params, num_layers, *,
                         weights_dtype=jnp.bfloat16, max_tile_rows=8192,
                         fuse_input_patchify=False):
    """QPNET forward with the whole post-patchify path inside one Pallas call."""
    B, Cin, H, W = x_nchw.shape
    assert Cin == 3 and H % 4 == 0 and W % 4 == 0
    P = (H // 4) * (W // 4)
    K = Cin * 16
    C = params["w0"].shape[0]
    O = params["wl"].shape[0]

    Kpad = _round_up(K, 128)
    Cpad = _round_up(C, 128)
    Opad = _round_up(O, 128)

    # ---- glue: patchify NCHW input, (c, kh, kw) per patch, lane-pad ----
    xp = x_nchw.reshape(B, Cin, H // 4, 4, W // 4, 4)
    xp = xp.transpose(0, 2, 4, 1, 3, 5).reshape(B, P, K)
    xp = jnp.pad(xp, ((0, 0), (0, 0), (0, Kpad - K))).astype(weights_dtype)

    # ---- glue: transpose / zero-pad weights for channel-last matmuls ----
    def pad2(w, r, c):
        return jnp.pad(w, ((0, r - w.shape[0]), (0, c - w.shape[1])))

    weight_arrays = [
        pad2(params["w0"].reshape(C, K).T, Kpad, Cpad).astype(weights_dtype),
        jnp.pad(params["b0"], (0, Cpad - C))[None, :].astype(jnp.float32),
    ]
    for w, b in params["mid"]:
        weight_arrays.append(pad2(w.T, Cpad, Cpad).astype(weights_dtype))
        weight_arrays.append(
            jnp.pad(b, (0, Cpad - C))[None, :].astype(jnp.float32))

    # Fuse path_q and lastOut_q across the (linear) average pool, in f32:
    #   W_fused = wq^T @ wl^T,  b_fused = bq @ wl^T + bl.
    wq = params["wq"].astype(jnp.float32)                # (128, C)
    wl = params["wl"].astype(jnp.float32)                # (O, 128)
    w_fused = wq.T @ wl.T                                # (C, O)
    b_fused = params["bq"].astype(jnp.float32) @ wl.T \
        + params["bl"].astype(jnp.float32)               # (O,)
    weight_arrays.append(pad2(w_fused, Cpad, Opad).astype(jnp.float32))
    weight_arrays.append(
        jnp.pad(b_fused, (0, Opad - O))[None, :].astype(jnp.float32))

    # ---- tile sizing against a conservative working budget (v7x-safe) ----
    x_item = jnp.dtype(weights_dtype).itemsize
    w_bytes = sum(int(a.size) * jnp.dtype(a.dtype).itemsize
                  for a in weight_arrays)
    bytes_per_row = (2 * Kpad * x_item        # double-buffered x tile
                     + 3 * Cpad * 4           # f32 feat temporaries in flight
                     + Cpad * x_item)         # low-precision copy for next dot
    budget = 24 << 20
    avail = max(budget - w_bytes, 64 * bytes_per_row)
    max_rows = max(8, min(max_tile_rows, avail // bytes_per_row))
    max_rows = max(8, (max_rows // 8) * 8)

    tile_b, tile_p = _choose_tiles(B, P, max_rows)
    num_b_tiles = B // tile_b
    num_p_tiles = pl.cdiv(P, tile_p)

    est = (w_bytes
           + 2 * tile_b * tile_p * Kpad * x_item
           + tile_b * tile_p * (3 * Cpad * 4 + Cpad * x_item)
           + tile_b * (Cpad + 2 * Opad) * 4)
    vmem_limit = int(min(max(2 * est, 8 << 20), 32 << 20))

    in_specs = [pl.BlockSpec((tile_b, tile_p, Kpad), lambda b, p: (b, p, 0))]
    for arr in weight_arrays:   # resident weights: constant block index
        in_specs.append(pl.BlockSpec(arr.shape, lambda b, p: (0, 0)))
    out_spec = pl.BlockSpec((tile_b, 1, Opad), lambda b, p: (b, 0, 0))

    allow_fusion = None
    if fuse_input_patchify:
        # Opt-in: let XLA fuse the patchify/pad/cast into the pallas_call input.
        allow_fusion = [True] + [False] * len(weight_arrays)

    kernel = functools.partial(_qpnet_kernel, num_layers, P, 1.0 / P)

    out = pl.pallas_call(
        kernel,
        out_shape=jax.ShapeDtypeStruct((B, 1, Opad), jnp.float32),
        grid_spec=pltpu.PrefetchScalarGridSpec(
            num_scalar_prefetch=0,
            grid=(num_b_tiles, num_p_tiles),
            in_specs=in_specs,
            out_specs=out_spec,
            scratch_shapes=[pltpu.VMEM((tile_b, Cpad), jnp.float32)],
        ),
        compiler_params=pltpu.CompilerParams(
            dimension_semantics=("parallel", "arbitrary"),
            vmem_limit_bytes=vmem_limit,
            allow_input_fusion=allow_fusion,
        ),
    )(xp, *weight_arrays)

    return out[:, 0, :O]


# ----------------------------------------------------------------------------
# Pure-JAX reference (mirrors the PyTorch NCHW convolution semantics)
# ----------------------------------------------------------------------------
def qpnet_forward_ref(x, params, num_layers):
    dn = ("NCHW", "OIHW", "NCHW")
    feat = jax.lax.conv_general_dilated(
        x, params["w0"], (4, 4), "VALID", dimension_numbers=dn
    ) + params["b0"][None, :, None, None]
    feat = jnp.maximum(feat, 0.0)
    for w, b in params["mid"]:
        feat = jax.lax.conv_general_dilated(
            feat, w[:, :, None, None], (1, 1), "VALID", dimension_numbers=dn
        ) + b[None, :, None, None]
        feat = jnp.maximum(feat, 0.0)
    q = jax.lax.conv_general_dilated(
        feat, params["wq"][:, :, None, None], (1, 1), "VALID",
        dimension_numbers=dn
    ) + params["bq"][None, :, None, None]
    q = q.mean(axis=(2, 3))                              # AvgPool2d(full) + view
    return q @ params["wl"].T + params["bl"]             # lastOut_q


# ----------------------------------------------------------------------------
# Deterministic parameter init (synthetic, matching nn.Module shapes)
# ----------------------------------------------------------------------------
def init_params(key, num_layers, num_channels, output_dim):
    keys = jax.random.split(key, 2 * (num_layers + 3))
    k = iter(keys)

    def dense(shape, fan_in):
        return jax.random.normal(next(k), shape, jnp.float32) / jnp.sqrt(fan_in)

    params = {
        "w0": dense((num_channels, 3, 4, 4), 3 * 16),
        "b0": dense((num_channels,), 3 * 16),
        "mid": [],
    }
    for _ in range(num_layers):
        params["mid"].append((dense((num_channels, num_channels), num_channels),
                              dense((num_channels,), num_channels)))
    params["wq"] = dense((128, num_channels), num_channels)
    params["bq"] = dense((128,), num_channels)
    params["wl"] = dense((output_dim, 128), 128)
    params["bl"] = dense((output_dim,), 128)
    return params


if __name__ == "__main__":
    num_layers = 2
    num_channels = 32
    output_dim = 4
    B, H, W = 2, 16, 16

    key = jax.random.PRNGKey(0)
    kx, kp = jax.random.split(key)
    x = jax.random.normal(kx, (B, 3, H, W), jnp.float32)
    params = init_params(kp, num_layers, num_channels, output_dim)

    ref = qpnet_forward_ref(x, params, num_layers)

    # f32 path: tight correctness check.
    fwd_f32 = jax.jit(functools.partial(
        qpnet_forward_pallas, num_layers=num_layers, weights_dtype=jnp.float32))
    out32 = jax.block_until_ready(fwd_f32(x, params))
    assert out32.shape == (B, output_dim)
    assert jnp.allclose(out32, ref, rtol=1e-4, atol=2e-4), (out32, ref)

    # bf16-weights path (perf config): loose tolerance for bf16 rounding.
    fwd_bf16 = jax.jit(functools.partial(
        qpnet_forward_pallas, num_layers=num_layers, weights_dtype=jnp.bfloat16))
    out16 = jax.block_until_ready(fwd_bf16(x, params))
    assert out16.shape == (B, output_dim)
    assert jnp.allclose(out16, ref, rtol=5e-2, atol=5e-2), (out16, ref)

    print("KERNEL_OK")
</pallas_src>

<mosaic_0001>
module attributes {stable_mosaic.version = 11 : i64} {
  func.func @_qpnet_kernel(%arg0: i32, %arg1: i32, %arg2: memref<2x16x128xf32, #tpu.memory_space<vmem>>, %arg3: memref<128x128xf32, #tpu.memory_space<vmem>>, %arg4: memref<1x128xf32, #tpu.memory_space<vmem>>, %arg5: memref<128x128xf32, #tpu.memory_space<vmem>>, %arg6: memref<1x128xf32, #tpu.memory_space<vmem>>, %arg7: memref<128x128xf32, #tpu.memory_space<vmem>>, %arg8: memref<1x128xf32, #tpu.memory_space<vmem>>, %arg9: memref<128x128xf32, #tpu.memory_space<vmem>>, %arg10: memref<1x128xf32, #tpu.memory_space<vmem>>, %arg11: memref<2x1x128xf32, #tpu.memory_space<vmem>>, %arg12: memref<2x128xf32, #tpu.memory_space<vmem>>) attributes {dimension_semantics = [#tpu.dimension_semantics<parallel>, #tpu.dimension_semantics<arbitrary>], iteration_bounds = array<i64: 1, 1>, scalar_prefetch = 0 : i64, scratch_operands = 1 : i64, tpu.core_type = #tpu.core_type<tc>, window_params = [{transform_indices = @transform_0, window_bounds = array<i64: 2, 16, 128>}, {pipeline_mode = #tpu.pipeline_mode<synchronous>, transform_indices = @transform_1, window_bounds = array<i64: 128, 128>}, {pipeline_mode = #tpu.pipeline_mode<synchronous>, transform_indices = @transform_2, window_bounds = array<i64: 1, 128>}, {pipeline_mode = #tpu.pipeline_mode<synchronous>, transform_indices = @transform_3, window_bounds = array<i64: 128, 128>}, {pipeline_mode = #tpu.pipeline_mode<synchronous>, transform_indices = @transform_4, window_bounds = array<i64: 1, 128>}, {pipeline_mode = #tpu.pipeline_mode<synchronous>, transform_indices = @transform_5, window_bounds = array<i64: 128, 128>}, {pipeline_mode = #tpu.pipeline_mode<synchronous>, transform_indices = @transform_6, window_bounds = array<i64: 1, 128>}, {pipeline_mode = #tpu.pipeline_mode<synchronous>, transform_indices = @transform_7, window_bounds = array<i64: 128, 128>}, {pipeline_mode = #tpu.pipeline_mode<synchronous>, transform_indices = @transform_8, window_bounds = array<i64: 1, 128>}, {transform_indices = @transform_9, window_bounds = array<i64: 2, 1, 128>}]} {
    %c0_i32 = arith.constant 0 : i32
    %0 = arith.cmpi eq, %arg1, %c0_i32 : i32
    %1 = arith.extui %0 : i1 to i32
    %c0_i32_0 = arith.constant 0 : i32
    %2 = arith.cmpi ne, %1, %c0_i32_0 : i32
    scf.if %2 {
      %cst_27 = arith.constant 0.000000e+00 : f32
      %34 = vector.broadcast %cst_27 : f32 to vector<2x128xf32>
      %c0_28 = arith.constant 0 : index
      %c0_29 = arith.constant 0 : index
      %35 = vector.load %arg12[%c0_28, %c0_29] : memref<2x128xf32, #tpu.memory_space<vmem>>, vector<2x128xf32>
      tpu.vector_store %arg12[%c0_28, %c0_29], %34 {strides = array<i32>} : memref<2x128xf32, #tpu.memory_space<vmem>>, vector<2x128xf32>,
    } else {
    }
    %c0 = arith.constant 0 : index
    %c0_1 = arith.constant 0 : index
    %c0_2 = arith.constant 0 : index
    %3 = vector.load %arg2[%c0, %c0_1, %c0_2] : memref<2x16x128xf32, #tpu.memory_space<vmem>>, vector<2x16x128xf32>
    %4 = vector.shape_cast %3 : vector<2x16x128xf32> to vector<32x128xf32>
    %c0_3 = arith.constant 0 : index
    %c0_4 = arith.constant 0 : index
    %5 = vector.load %arg3[%c0_3, %c0_4] : memref<128x128xf32, #tpu.memory_space<vmem>>, vector<128x128xf32>
    %c0_5 = arith.constant 0 : index
    %c0_6 = arith.constant 0 : index
    %6 = vector.load %arg4[%c0_5, %c0_6] : memref<1x128xf32, #tpu.memory_space<vmem>>, vector<1x128xf32>
    %cst = arith.constant dense<0.000000e+00> : vector<32x128xf32>
    %7 = tpu.matmul %4, %5, %cst {dimension_numbers = #tpu.dot_dimension_numbers<[1], [0], [0], [1], [0, 0, 1, 1], [], []>} : vector<32x128xf32>, vector<128x128xf32>, vector<32x128xf32> -> vector<32x128xf32>
    %8 = vector.broadcast %6 : vector<1x128xf32> to vector<32x128xf32>
    %9 = arith.addf %7, %8 : vector<32x128xf32>
    %cst_7 = arith.constant 0.000000e+00 : f32
    %10 = vector.broadcast %cst_7 : f32 to vector<32x128xf32>
    %11 = arith.maximumf %9, %10 : vector<32x128xf32>
    %c0_8 = arith.constant 0 : index
    %c0_9 = arith.constant 0 : index
    %12 = vector.load %arg5[%c0_8, %c0_9] : memref<128x128xf32, #tpu.memory_space<vmem>>, vector<128x128xf32>
    %c0_10 = arith.constant 0 : index
    %c0_11 = arith.constant 0 : index
    %13 = vector.load %arg6[%c0_10, %c0_11] : memref<1x128xf32, #tpu.memory_space<vmem>>, vector<1x128xf32>
    %cst_12 = arith.constant dense<0.000000e+00> : vector<32x128xf32>
    %14 = tpu.matmul %11, %12, %cst_12 {dimension_numbers = #tpu.dot_dimension_numbers<[1], [0], [0], [1], [0, 0, 1, 1], [], []>} : vector<32x128xf32>, vector<128x128xf32>, vector<32x128xf32> -> vector<32x128xf32>
    %15 = vector.broadcast %13 : vector<1x128xf32> to vector<32x128xf32>
    %16 = arith.addf %14, %15 : vector<32x128xf32>
    %cst_13 = arith.constant 0.000000e+00 : f32
    %17 = vector.broadcast %cst_13 : f32 to vector<32x128xf32>
    %18 = arith.maximumf %16, %17 : vector<32x128xf32>
    %c0_14 = arith.constant 0 : index
    %c0_15 = arith.constant 0 : index
    %19 = vector.load %arg7[%c0_14, %c0_15] : memref<128x128xf32, #tpu.memory_space<vmem>>, vector<128x128xf32>
    %c0_16 = arith.constant 0 : index
    %c0_17 = arith.constant 0 : index
    %20 = vector.load %arg8[%c0_16, %c0_17] : memref<1x128xf32, #tpu.memory_space<vmem>>, vector<1x128xf32>
    %cst_18 = arith.constant dense<0.000000e+00> : vector<32x128xf32>
    %21 = tpu.matmul %18, %19, %cst_18 {dimension_numbers = #tpu.dot_dimension_numbers<[1], [0], [0], [1], [0, 0, 1, 1], [], []>} : vector<32x128xf32>, vector<128x128xf32>, vector<32x128xf32> -> vector<32x128xf32>
    %22 = vector.broadcast %20 : vector<1x128xf32> to vector<32x128xf32>
    %23 = arith.addf %21, %22 : vector<32x128xf32>
    %cst_19 = arith.constant 0.000000e+00 : f32
    %24 = vector.broadcast %cst_19 : f32 to vector<32x128xf32>
    %25 = arith.maximumf %23, %24 : vector<32x128xf32>
    %26 = vector.shape_cast %25 : vector<32x128xf32> to vector<2x16x128xf32>
    %c0_20 = arith.constant 0 : index
    %c0_21 = arith.constant 0 : index
    %27 = vector.load %arg12[%c0_20, %c0_21] : memref<2x128xf32, #tpu.memory_space<vmem>>, vector<2x128xf32>
    %cst_22 = arith.constant dense<0.000000e+00> : vector<2x128xf32>
    %28 = vector.multi_reduction <add>, %26, %cst_22 [1] : vector<2x16x128xf32> to vector<2x128xf32>
    %29 = arith.addf %27, %28 : vector<2x128xf32>
    %c0_23 = arith.constant 0 : index
    %c0_24 = arith.constant 0 : index
    %30 = vector.load %arg12[%c0_23, %c0_24] : memref<2x128xf32, #tpu.memory_space<vmem>>, vector<2x128xf32>
    tpu.vector_store %arg12[%c0_23, %c0_24], %29 {strides = array<i32>} : memref<2x128xf32, #tpu.memory_space<vmem>>, vector<2x128xf32>,
    %c0_i32_25 = arith.constant 0 : i32
    %31 = arith.cmpi eq, %arg1, %c0_i32_25 : i32
    %32 = arith.extui %31 : i1 to i32
    %c0_i32_26 = arith.constant 0 : i32
    %33 = arith.cmpi ne, %32, %c0_i32_26 : i32
    scf.if %33 {
      %c0_27 = arith.constant 0 : index
      %c0_28 = arith.constant 0 : index
      %34 = vector.load %arg9[%c0_27, %c0_28] : memref<128x128xf32, #tpu.memory_space<vmem>>, vector<128x128xf32>
      %c0_29 = arith.constant 0 : index
      %c0_30 = arith.constant 0 : index
      %35 = vector.load %arg10[%c0_29, %c0_30] : memref<1x128xf32, #tpu.memory_space<vmem>>, vector<1x128xf32>
      %c0_31 = arith.constant 0 : index
      %c0_32 = arith.constant 0 : index
      %36 = vector.load %arg12[%c0_31, %c0_32] : memref<2x128xf32, #tpu.memory_space<vmem>>, vector<2x128xf32>
      %cst_33 = arith.constant 6.250000e-02 : f32
      %37 = vector.broadcast %cst_33 : f32 to vector<2x128xf32>
      %38 = arith.mulf %36, %37 : vector<2x128xf32>
      %cst_34 = arith.constant dense<0.000000e+00> : vector<2x128xf32>
      %39 = tpu.matmul %38, %34, %cst_34 {dimension_numbers = #tpu.dot_dimension_numbers<[1], [0], [0], [1], [0, 0, 1, 1], [], []>} : vector<2x128xf32>, vector<128x128xf32>, vector<2x128xf32> -> vector<2x128xf32>
      %40 = vector.broadcast %35 : vector<1x128xf32> to vector<2x128xf32>
      %41 = arith.addf %39, %40 : vector<2x128xf32>
      %42 = vector.shape_cast %41 : vector<2x128xf32> to vector<2x1x128xf32>
      %c0_35 = arith.constant 0 : index
      %c0_36 = arith.constant 0 : index
      %c0_37 = arith.constant 0 : index
      %43 = vector.load %arg11[%c0_35, %c0_36, %c0_37] : memref<2x1x128xf32, #tpu.memory_space<vmem>>, vector<2x1x128xf32>
      tpu.vector_store %arg11[%c0_35, %c0_36, %c0_37], %42 {strides = array<i32>} : memref<2x1x128xf32, #tpu.memory_space<vmem>>, vector<2x1x128xf32>,
    } else {
    }
    return
  }
  func.func @transform_0(%arg0: i32, %arg1: i32) -> (i32, i32, i32) {
    %c0_i32 = arith.constant 0 : i32
    %c0_i32_0 = arith.constant 0 : i32
    return %arg0, %arg1, %c0_i32 : i32, i32, i32
  }
  func.func @transform_1(%arg0: i32, %arg1: i32) -> (i32, i32) {
    %c0_i32 = arith.constant 0 : i32
    %c0_i32_0 = arith.constant 0 : i32
    %c0_i32_1 = arith.constant 0 : i32
    return %c0_i32, %c0_i32_0 : i32, i32
  }
  func.func @transform_2(%arg0: i32, %arg1: i32) -> (i32, i32) {
    %c0_i32 = arith.constant 0 : i32
    %c0_i32_0 = arith.constant 0 : i32
    %c0_i32_1 = arith.constant 0 : i32
    return %c0_i32, %c0_i32_0 : i32, i32
  }
  func.func @transform_3(%arg0: i32, %arg1: i32) -> (i32, i32) {
    %c0_i32 = arith.constant 0 : i32
    %c0_i32_0 = arith.constant 0 : i32
    %c0_i32_1 = arith.constant 0 : i32
    return %c0_i32, %c0_i32_0 : i32, i32
  }
  func.func @transform_4(%arg0: i32, %arg1: i32) -> (i32, i32) {
    %c0_i32 = arith.constant 0 : i32
    %c0_i32_0 = arith.constant 0 : i32
    %c0_i32_1 = arith.constant 0 : i32
    return %c0_i32, %c0_i32_0 : i32, i32
  }
  func.func @transform_5(%arg0: i32, %arg1: i32) -> (i32, i32) {
    %c0_i32 = arith.constant 0 : i32
    %c0_i32_0 = arith.constant 0 : i32
    %c0_i32_1 = arith.constant 0 : i32
    return %c0_i32, %c0_i32_0 : i32, i32
  }
  func.func @transform_6(%arg0: i32, %arg1: i32) -> (i32, i32) {
    %c0_i32 = arith.constant 0 : i32
    %c0_i32_0 = arith.constant 0 : i32
    %c0_i32_1 = arith.constant 0 : i32
    return %c0_i32, %c0_i32_0 : i32, i32
  }
  func.func @transform_7(%arg0: i32, %arg1: i32) -> (i32, i32) {
    %c0_i32 = arith.constant 0 : i32
    %c0_i32_0 = arith.constant 0 : i32
    %c0_i32_1 = arith.constant 0 : i32
    return %c0_i32, %c0_i32_0 : i32, i32
  }
  func.func @transform_8(%arg0: i32, %arg1: i32) -> (i32, i32) {
    %c0_i32 = arith.constant 0 : i32
    %c0_i32_0 = arith.constant 0 : i32
    %c0_i32_1 = arith.constant 0 : i32
    return %c0_i32, %c0_i32_0 : i32, i32
  }
  func.func @transform_9(%arg0: i32, %arg1: i32) -> (i32, i32, i32) {
    %c0_i32 = arith.constant 0 : i32
    %c0_i32_0 = arith.constant 0 : i32
    %c0_i32_1 = arith.constant 0 : i32
    return %arg0, %c0_i32, %c0_i32_0 : i32, i32, i32
  }
}

</mosaic_0001>

<llo_original>
// kernel: qpnet_forward_pallas.1
$region0: #{qpnet_forward_pallas.1}
  #allocation0 [shape = 'u32[]', space=smem, size = 0x4, offset = 0x4, fixed_abs, tag = 'smem constant byte address 0x4 - core index']
  #allocation1 [shape = 'u32[144,128]{1,0:T(1,128)}', space=vmem, size = 0x12000, scoped, tag = 'internal scratch']
  #allocation2 [shape = 'f32[2,128]{1,0:T(2,128)}', space=vmem, size = 0x400, scoped, tag = 'scratch operand']
  %s0 = inlined_call_operand.vmem [shape: f32[2,16,128], index: 0, kind: input, shape index: {}]
  %s1 = inlined_call_operand.vmem [shape: f32[128,128], index: 1, kind: input, shape index: {}]
  %s2 = inlined_call_operand.vmem [shape: f32[1,128], index: 2, kind: input, shape index: {}]
  %s3 = inlined_call_operand.vmem [shape: f32[128,128], index: 3, kind: input, shape index: {}]
  %s4 = inlined_call_operand.vmem [shape: f32[1,128], index: 4, kind: input, shape index: {}]
  %s5 = inlined_call_operand.vmem [shape: f32[128,128], index: 5, kind: input, shape index: {}]
  %s6 = inlined_call_operand.vmem [shape: f32[1,128], index: 6, kind: input, shape index: {}]
  %s7 = inlined_call_operand.vmem [shape: f32[128,128], index: 7, kind: input, shape index: {}]
  %s8 = inlined_call_operand.vmem [shape: f32[1,128], index: 8, kind: input, shape index: {}]
  %s9 = inlined_call_operand.hbm [shape: f32[2,1,128], index: 9, kind: output, shape index: {}]
  %s10 = sld [smem:[#allocation0]]
  $region54: #{qpnet_forward_pallas.1} parent=0
    _
  %s12 = ssub.s32 1, %s10
  %s13 = scalar_select 0, %s12, %s10
  $region1: #{qpnet_forward_pallas.1} parent=0
    #allocation3 [shape = 'u8[1024]{0}', space=vmem, size = 0x400, scoped, tag = 'output window, operand 0, single buffered']
    #allocation4 [shape = 's32[1]{0}', space=sflag, size = 0x4, scoped, tag = 'scoped memory for qpnet_forward_pallas.1']
    %14 = vsyncpa [#allocation4], 0
    // Predicated region
    $region2: #{qpnet_forward_pallas.1} parent=1 // pred_check
      _
    $region3: #{qpnet_forward_pallas.1} parent=1 // pred_check_branch
      %16 = sbr.rel (0) target = $region5
    $region4: #{qpnet_forward_pallas.1} parent=1 // pred_region
      _
    $region5: #{qpnet_forward_pallas.1} parent=1 // pred_fallthru
      _
    // Predicated region
    $region6: #{qpnet_forward_pallas.1} parent=1 // pred_check
      _
    $region7: #{qpnet_forward_pallas.1} parent=1 // pred_check_branch
      %18 = sbr.rel (0) target = $region9
    $region8: #{qpnet_forward_pallas.1} parent=1 // pred_region
      _
    $region9: #{qpnet_forward_pallas.1} parent=1 // pred_fallthru
      _
    // Predicated region
    $region10: #{qpnet_forward_pallas.1} parent=1 // pred_check
      _
    $region11: #{qpnet_forward_pallas.1} parent=1 // pred_check_branch
      %20 = sbr.rel (0) target = $region13
    $region12: #{qpnet_forward_pallas.1} parent=1 // pred_region
      _
    $region13: #{qpnet_forward_pallas.1} parent=1 // pred_fallthru
      _
    // Predicated region
    $region14: #{qpnet_forward_pallas.1} parent=1 // pred_check
      _
    $region15: #{qpnet_forward_pallas.1} parent=1 // pred_check_branch
      %22 = sbr.rel (0) target = $region17
    $region16: #{qpnet_forward_pallas.1} parent=1 // pred_region
      _
    $region17: #{qpnet_forward_pallas.1} parent=1 // pred_fallthru
      _
    // Predicated region
    $region18: #{qpnet_forward_pallas.1} parent=1 // pred_check
      _
    $region19: #{qpnet_forward_pallas.1} parent=1 // pred_check_branch
      %24 = sbr.rel (0) target = $region21
    $region20: #{qpnet_forward_pallas.1} parent=1 // pred_region
      _
    $region21: #{qpnet_forward_pallas.1} parent=1 // pred_fallthru
      _
    // Predicated region
    $region22: #{qpnet_forward_pallas.1} parent=1 // pred_check
      _
    $region23: #{qpnet_forward_pallas.1} parent=1 // pred_check_branch
      %26 = sbr.rel (0) target = $region25
    $region24: #{qpnet_forward_pallas.1} parent=1 // pred_region
      _
    $region25: #{qpnet_forward_pallas.1} parent=1 // pred_fallthru
      _
    // Predicated region
    $region26: #{qpnet_forward_pallas.1} parent=1 // pred_check
      _
    $region27: #{qpnet_forward_pallas.1} parent=1 // pred_check_branch
      %28 = sbr.rel (0) target = $region29
    $region28: #{qpnet_forward_pallas.1} parent=1 // pred_region
      _
    $region29: #{qpnet_forward_pallas.1} parent=1 // pred_fallthru
      _
    // Predicated region
    $region30: #{qpnet_forward_pallas.1} parent=1 // pred_check
      _
    $region31: #{qpnet_forward_pallas.1} parent=1 // pred_check_branch
      %30 = sbr.rel (0) target = $region33
    $region32: #{qpnet_forward_pallas.1} parent=1 // pred_region
      _
    $region33: #{qpnet_forward_pallas.1} parent=1 // pred_fallthru
      _
    // Predicated region
    $region34: #{qpnet_forward_pallas.1} parent=1 // pred_check
      _
    $region35: #{qpnet_forward_pallas.1} parent=1 // pred_check_branch
      %32 = sbr.rel (0) target = $region37
    $region36: #{qpnet_forward_pallas.1} parent=1 // pred_region
      _
    $region37: #{qpnet_forward_pallas.1} parent=1 // pred_fallthru
      _
    %p33 = scmp.eq.s32.totalorder 0, 0
    // Predicated region
    $region38: #{qpnet_forward_pallas.1} parent=1 // pred_check
      %p34 = pneg %p33
    $region39: #{qpnet_forward_pallas.1} parent=1 // pred_check_branch
      %36 = sbr.rel (%p34) target = $region41
    $region40: #{qpnet_forward_pallas.1} parent=1 // pred_region
      %37 = vst [vmem:[#allocation2] sm:$0x3] 0.0
    $region41: #{qpnet_forward_pallas.1} parent=1 // pred_fallthru
      _
    %v38 = vld [vmem:[%s0] sm:$0xff]
    %v39 = vld [vmem:[%s0 + $0x8] sm:$0xff]
    %v40 = vld [vmem:[%s0 + $0x10] sm:$0xff]
    %v41 = vld [vmem:[%s0 + $0x18] sm:$0xff]
    %v42 = vld [vmem:[%s1] sm:$0xff]
    %v43 = vld [vmem:[%s1 + $0x8] sm:$0xff]
    %v44 = vld [vmem:[%s1 + $0x10] sm:$0xff]
    %v45 = vld [vmem:[%s1 + $0x18] sm:$0xff]
    %v46 = vld [vmem:[%s1 + $0x20] sm:$0xff]
    %v47 = vld [vmem:[%s1 + $0x28] sm:$0xff]
    %v48 = vld [vmem:[%s1 + $0x30] sm:$0xff]
    %v49 = vld [vmem:[%s1 + $0x38] sm:$0xff]
    %v50 = vld [vmem:[%s1 + $0x40] sm:$0xff]
    %v51 = vld [vmem:[%s1 + $0x48] sm:$0xff]
    %v52 = vld [vmem:[%s1 + $0x50] sm:$0xff]
    %v53 = vld [vmem:[%s1 + $0x58] sm:$0xff]
    %v54 = vld [vmem:[%s1 + $0x60] sm:$0xff]
    %v55 = vld [vmem:[%s1 + $0x68] sm:$0xff]
    %v56 = vld [vmem:[%s1 + $0x70] sm:$0xff]
    %v57 = vld [vmem:[%s1 + $0x78] sm:$0xff]
    %v58 = vld [vmem:[%s2] sm:$0x1]
    %v60 = vlaneseq
    %v61 = vshrl.u32 %v60, 7
    %v62 = vsub.s32 0, %v61
    %v63 = vrot.slane %v58, %v62
    %65 = vmatprep.subr.mxu0 0.0
    %66 = vmatpush1.msra.mxu0 %v57
    %67 = vmatprep.subr.mxu0 0.0
    %68 = vmatpush1.msra.mxu0 %v56
    %69 = vmatprep.subr.mxu0 0.0
    %70 = vmatpush1.msra.mxu0 %v55
    %71 = vmatprep.subr.mxu0 0.0
    %72 = vmatpush1.msra.mxu0 %v54
    %73 = vmatprep.subr.mxu0 0.0
    %74 = vmatpush1.msra.mxu0 %v53
    %75 = vmatprep.subr.mxu0 0.0
    %76 = vmatpush1.msra.mxu0 %v52
    %77 = vmatprep.subr.mxu0 0.0
    %78 = vmatpush1.msra.mxu0 %v51
    %79 = vmatprep.subr.mxu0 0.0
    %80 = vmatpush1.msra.mxu0 %v50
    %81 = vmatprep.subr.mxu0 0.0
    %82 = vmatpush1.msra.mxu0 %v49
    %83 = vmatprep.subr.mxu0 0.0
    %84 = vmatpush1.msra.mxu0 %v48
    %85 = vmatprep.subr.mxu0 0.0
    %86 = vmatpush1.msra.mxu0 %v47
    %87 = vmatprep.subr.mxu0 0.0
    %88 = vmatpush1.msra.mxu0 %v46
    %89 = vmatprep.subr.mxu0 0.0
    %90 = vmatpush1.msra.mxu0 %v45
    %91 = vmatprep.subr.mxu0 0.0
    %92 = vmatpush1.msra.mxu0 %v44
    %93 = vmatprep.subr.mxu0 0.0
    %94 = vmatpush1.msra.mxu0 %v43
    %95 = vmatprep.subr.mxu0 0.0
    %96 = vmatpush1.msra.mxu0 %v42
    %97 = vmatprep.subr.mxu0 0.0
    %98 = vmatpush2.msra.mxu0 0.0
    %99 = vmatprep.subr.mxu0 0.0
    %100 = vmatpush2.msra.mxu0 0.0
    %101 = vmatprep.subr.mxu0 0.0
    %102 = vmatpush2.msra.mxu0 0.0
    %103 = vmatprep.subr.mxu0 0.0
    %104 = vmatpush2.msra.mxu0 0.0
    %105 = vmatprep.subr.mxu0 0.0
    %106 = vmatpush2.msra.mxu0 0.0
    %107 = vmatprep.subr.mxu0 0.0
    %108 = vmatpush2.msra.mxu0 0.0
    %109 = vmatprep.subr.mxu0 0.0
    %110 = vmatpush2.msra.mxu0 0.0
    %111 = vmatprep.subr.mxu0 0.0
    %112 = vmatpush2.msra.mxu0 0.0
    %113 = vmatprep.subr.mxu0 0.0
    %114 = vmatpush2.msra.mxu0 0.0
    %115 = vmatprep.subr.mxu0 0.0
    %116 = vmatpush2.msra.mxu0 0.0
    %117 = vmatprep.subr.mxu0 0.0
    %118 = vmatpush2.msra.mxu0 0.0
    %119 = vmatprep.subr.mxu0 0.0
    %120 = vmatpush2.msra.mxu0 0.0
    %121 = vmatprep.subr.mxu0 0.0
    %122 = vmatpush2.msra.mxu0 0.0
    %123 = vmatprep.subr.mxu0 0.0
    %124 = vmatpush2.msra.mxu0 0.0
    %125 = vmatprep.subr.mxu0 0.0
    %126 = vmatpush2.msra.mxu0 0.0
    %127 = vmatprep.subr.mxu0 0.0
    %128 = vmatpush2.msra.mxu0 0.0
    %129 = vmatprep.mubr.f32.mxu0 0.0
    %130 = vmatmul.mubr.f32.gmra.mxu0 %v38
    %v131 = vpop.f32.mrf.mxu0
    %v132 = vadd.f32 %v63, %v131
    %v133 = vpop.f32.mrf.mxu0
    %134 = vmatprep.mubr.f32.mxu0 0.0
    %135 = vmatmul.mubr.f32.gmra.mxu0 %v39
    %v136 = vpop.f32.mrf.mxu0
    %v137 = vadd.f32 %v63, %v136
    %v138 = vpop.f32.mrf.mxu0
    %139 = vmatprep.mubr.f32.mxu0 0.0
    %140 = vmatmul.mubr.f32.gmra.mxu0 %v40
    %v141 = vpop.f32.mrf.mxu0
    %v142 = vadd.f32 %v63, %v141
    %v143 = vpop.f32.mrf.mxu0
    %144 = vmatprep.mubr.f32.mxu0 0.0
    %145 = vmatmul.mubr.f32.gmra.mxu0 %v41
    %v146 = vpop.f32.mrf.mxu0
    %v147 = vadd.f32 %v63, %v146
    %v148 = vpop.f32.mrf.mxu0
    %149 = vdwg.mxu0
    %v150 = vmax.f32 %v132, 0.0
    %v151 = vmax.f32 %v137, 0.0
    %v152 = vmax.f32 %v142, 0.0
    %v153 = vmax.f32 %v147, 0.0
    %v154 = vld [vmem:[%s3] sm:$0xff]
    %v155 = vld [vmem:[%s3 + $0x8] sm:$0xff]
    %v156 = vld [vmem:[%s3 + $0x10] sm:$0xff]
    %v157 = vld [vmem:[%s3 + $0x18] sm:$0xff]
    %v158 = vld [vmem:[%s3 + $0x20] sm:$0xff]
    %v159 = vld [vmem:[%s3 + $0x28] sm:$0xff]
    %v160 = vld [vmem:[%s3 + $0x30] sm:$0xff]
    %v161 = vld [vmem:[%s3 + $0x38] sm:$0xff]
    %v162 = vld [vmem:[%s3 + $0x40] sm:$0xff]
    %v163 = vld [vmem:[%s3 + $0x48] sm:$0xff]
    %v164 = vld [vmem:[%s3 + $0x50] sm:$0xff]
    %v165 = vld [vmem:[%s3 + $0x58] sm:$0xff]
    %v166 = vld [vmem:[%s3 + $0x60] sm:$0xff]
    %v167 = vld [vmem:[%s3 + $0x68] sm:$0xff]
    %v168 = vld [vmem:[%s3 + $0x70] sm:$0xff]
    %v169 = vld [vmem:[%s3 + $0x78] sm:$0xff]
    %v170 = vld [vmem:[%s4] sm:$0x1]
    %v172 = vlaneseq
    %v173 = vshrl.u32 %v172, 7
    %v174 = vsub.s32 0, %v173
    %v175 = vrot.slane %v170, %v174
    %177 = vmatprep.subr.mxu0 0.0
    %178 = vmatpush1.msra.mxu0 %v169
    %179 = vmatprep.subr.mxu0 0.0
    %180 = vmatpush1.msra.mxu0 %v168
    %181 = vmatprep.subr.mxu0 0.0
    %182 = vmatpush1.msra.mxu0 %v167
    %183 = vmatprep.subr.mxu0 0.0
    %184 = vmatpush1.msra.mxu0 %v166
    %185 = vmatprep.subr.mxu0 0.0
    %186 = vmatpush1.msra.mxu0 %v165
    %187 = vmatprep.subr.mxu0 0.0
    %188 = vmatpush1.msra.mxu0 %v164
    %189 = vmatprep.subr.mxu0 0.0
    %190 = vmatpush1.msra.mxu0 %v163
    %191 = vmatprep.subr.mxu0 0.0
    %192 = vmatpush1.msra.mxu0 %v162
    %193 = vmatprep.subr.mxu0 0.0
    %194 = vmatpush1.msra.mxu0 %v161
    %195 = vmatprep.subr.mxu0 0.0
    %196 = vmatpush1.msra.mxu0 %v160
    %197 = vmatprep.subr.mxu0 0.0
    %198 = vmatpush1.msra.mxu0 %v159
    %199 = vmatprep.subr.mxu0 0.0
    %200 = vmatpush1.msra.mxu0 %v158
    %201 = vmatprep.subr.mxu0 0.0
    %202 = vmatpush1.msra.mxu0 %v157
    %203 = vmatprep.subr.mxu0 0.0
    %204 = vmatpush1.msra.mxu0 %v156
    %205 = vmatprep.subr.mxu0 0.0
    %206 = vmatpush1.msra.mxu0 %v155
    %207 = vmatprep.subr.mxu0 0.0
    %208 = vmatpush1.msra.mxu0 %v154
    %209 = vmatprep.subr.mxu0 0.0
    %210 = vmatpush2.msra.mxu0 0.0
    %211 = vmatprep.subr.mxu0 0.0
    %212 = vmatpush2.msra.mxu0 0.0
    %213 = vmatprep.subr.mxu0 0.0
    %214 = vmatpush2.msra.mxu0 0.0
    %215 = vmatprep.subr.mxu0 0.0
    %216 = vmatpush2.msra.mxu0 0.0
    %217 = vmatprep.subr.mxu0 0.0
    %218 = vmatpush2.msra.mxu0 0.0
    %219 = vmatprep.subr.mxu0 0.0
    %220 = vmatpush2.msra.mxu0 0.0
    %221 = vmatprep.subr.mxu0 0.0
    %222 = vmatpush2.msra.mxu0 0.0
    %223 = vmatprep.subr.mxu0 0.0
    %224 = vmatpush2.msra.mxu0 0.0
    %225 = vmatprep.subr.mxu0 0.0
    %226 = vmatpush2.msra.mxu0 0.0
    %227 = vmatprep.subr.mxu0 0.0
    %228 = vmatpush2.msra.mxu0 0.0
    %229 = vmatprep.subr.mxu0 0.0
    %230 = vmatpush2.msra.mxu0 0.0
    %231 = vmatprep.subr.mxu0 0.0
    %232 = vmatpush2.msra.mxu0 0.0
    %233 = vmatprep.subr.mxu0 0.0
    %234 = vmatpush2.msra.mxu0 0.0
    %235 = vmatprep.subr.mxu0 0.0
    %236 = vmatpush2.msra.mxu0 0.0
    %237 = vmatprep.subr.mxu0 0.0
    %238 = vmatpush2.msra.mxu0 0.0
    %239 = vmatprep.subr.mxu0 0.0
    %240 = vmatpush2.msra.mxu0 0.0
    %241 = vmatprep.mubr.f32.mxu0 0.0
    %242 = vmatmul.mubr.f32.gmra.mxu0 %v150
    %v243 = vpop.f32.mrf.mxu0
    %v244 = vadd.f32 %v175, %v243
    %v245 = vpop.f32.mrf.mxu0
    %246 = vmatprep.mubr.f32.mxu0 0.0
    %247 = vmatmul.mubr.f32.gmra.mxu0 %v151
    %v248 = vpop.f32.mrf.mxu0
    %v249 = vadd.f32 %v175, %v248
    %v250 = vpop.f32.mrf.mxu0
    %251 = vmatprep.mubr.f32.mxu0 0.0
    %252 = vmatmul.mubr.f32.gmra.mxu0 %v152
    %v253 = vpop.f32.mrf.mxu0
    %v254 = vadd.f32 %v175, %v253
    %v255 = vpop.f32.mrf.mxu0
    %256 = vmatprep.mubr.f32.mxu0 0.0
    %257 = vmatmul.mubr.f32.gmra.mxu0 %v153
    %v258 = vpop.f32.mrf.mxu0
    %v259 = vadd.f32 %v175, %v258
    %v260 = vpop.f32.mrf.mxu0
    %261 = vdwg.mxu0
    %v262 = vmax.f32 %v244, 0.0
    %v263 = vmax.f32 %v249, 0.0
    %v264 = vmax.f32 %v254, 0.0
    %v265 = vmax.f32 %v259, 0.0
    %v266 = vld [vmem:[%s5] sm:$0xff]
    %v267 = vld [vmem:[%s5 + $0x8] sm:$0xff]
    %v268 = vld [vmem:[%s5 + $0x10] sm:$0xff]
    %v269 = vld [vmem:[%s5 + $0x18] sm:$0xff]
    %v270 = vld [vmem:[%s5 + $0x20] sm:$0xff]
    %v271 = vld [vmem:[%s5 + $0x28] sm:$0xff]
    %v272 = vld [vmem:[%s5 + $0x30] sm:$0xff]
    %v273 = vld [vmem:[%s5 + $0x38] sm:$0xff]
    %v274 = vld [vmem:[%s5 + $0x40] sm:$0xff]
    %v275 = vld [vmem:[%s5 + $0x48] sm:$0xff]
    %v276 = vld [vmem:[%s5 + $0x50] sm:$0xff]
    %v277 = vld [vmem:[%s5 + $0x58] sm:$0xff]
    %v278 = vld [vmem:[%s5 + $0x60] sm:$0xff]
    %v279 = vld [vmem:[%s5 + $0x68] sm:$0xff]
    %v280 = vld [vmem:[%s5 + $0x70] sm:$0xff]
    %v281 = vld [vmem:[%s5 + $0x78] sm:$0xff]
    %v282 = vld [vmem:[%s6] sm:$0x1]
    %v284 = vlaneseq
    %v285 = vshrl.u32 %v284, 7
    %v286 = vsub.s32 0, %v285
    %v287 = vrot.slane %v282, %v286
    %289 = vmatprep.subr.mxu0 0.0
    %290 = vmatpush1.msra.mxu0 %v281
    %291 = vmatprep.subr.mxu0 0.0
    %292 = vmatpush1.msra.mxu0 %v280
    %293 = vmatprep.subr.mxu0 0.0
    %294 = vmatpush1.msra.mxu0 %v279
    %295 = vmatprep.subr.mxu0 0.0
    %296 = vmatpush1.msra.mxu0 %v278
    %297 = vmatprep.subr.mxu0 0.0
    %298 = vmatpush1.msra.mxu0 %v277
    %299 = vmatprep.subr.mxu0 0.0
    %300 = vmatpush1.msra.mxu0 %v276
    %301 = vmatprep.subr.mxu0 0.0
    %302 = vmatpush1.msra.mxu0 %v275
    %303 = vmatprep.subr.mxu0 0.0
    %304 = vmatpush1.msra.mxu0 %v274
    %305 = vmatprep.subr.mxu0 0.0
    %306 = vmatpush1.msra.mxu0 %v273
    %307 = vmatprep.subr.mxu0 0.0
    %308 = vmatpush1.msra.mxu0 %v272
    %309 = vmatprep.subr.mxu0 0.0
    %310 = vmatpush1.msra.mxu0 %v271
    %311 = vmatprep.subr.mxu0 0.0
    %312 = vmatpush1.msra.mxu0 %v270
    %313 = vmatprep.subr.mxu0 0.0
    %314 = vmatpush1.msra.mxu0 %v269
    %315 = vmatprep.subr.mxu0 0.0
    %316 = vmatpush1.msra.mxu0 %v268
    %317 = vmatprep.subr.mxu0 0.0
    %318 = vmatpush1.msra.mxu0 %v267
    %319 = vmatprep.subr.mxu0 0.0
    %320 = vmatpush1.msra.mxu0 %v266
    %321 = vmatprep.subr.mxu0 0.0
    %322 = vmatpush2.msra.mxu0 0.0
    %323 = vmatprep.subr.mxu0 0.0
    %324 = vmatpush2.msra.mxu0 0.0
    %325 = vmatprep.subr.mxu0 0.0
    %326 = vmatpush2.msra.mxu0 0.0
    %327 = vmatprep.subr.mxu0 0.0
    %328 = vmatpush2.msra.mxu0 0.0
    %329 = vmatprep.subr.mxu0 0.0
    %330 = vmatpush2.msra.mxu0 0.0
    %331 = vmatprep.subr.mxu0 0.0
    %332 = vmatpush2.msra.mxu0 0.0
    %333 = vmatprep.subr.mxu0 0.0
    %334 = vmatpush2.msra.mxu0 0.0
    %335 = vmatprep.subr.mxu0 0.0
    %336 = vmatpush2.msra.mxu0 0.0
    %337 = vmatprep.subr.mxu0 0.0
    %338 = vmatpush2.msra.mxu0 0.0
    %339 = vmatprep.subr.mxu0 0.0
    %340 = vmatpush2.msra.mxu0 0.0
    %341 = vmatprep.subr.mxu0 0.0
    %342 = vmatpush2.msra.mxu0 0.0
    %343 = vmatprep.subr.mxu0 0.0
    %344 = vmatpush2.msra.mxu0 0.0
    %345 = vmatprep.subr.mxu0 0.0
    %346 = vmatpush2.msra.mxu0 0.0
    %347 = vmatprep.subr.mxu0 0.0
    %348 = vmatpush2.msra.mxu0 0.0
    %349 = vmatprep.subr.mxu0 0.0
    %350 = vmatpush2.msra.mxu0 0.0
    %351 = vmatprep.subr.mxu0 0.0
    %352 = vmatpush2.msra.mxu0 0.0
    %353 = vmatprep.mubr.f32.mxu0 0.0
    %354 = vmatmul.mubr.f32.gmra.mxu0 %v262
    %v355 = vpop.f32.mrf.mxu0
    %v356 = vadd.f32 %v287, %v355
    %v357 = vpop.f32.mrf.mxu0
    %358 = vmatprep.mubr.f32.mxu0 0.0
    %359 = vmatmul.mubr.f32.gmra.mxu0 %v263
    %v360 = vpop.f32.mrf.mxu0
    %v361 = vadd.f32 %v287, %v360
    %v362 = vpop.f32.mrf.mxu0
    %363 = vmatprep.mubr.f32.mxu0 0.0
    %364 = vmatmul.mubr.f32.gmra.mxu0 %v264
    %v365 = vpop.f32.mrf.mxu0
    %v366 = vadd.f32 %v287, %v365
    %v367 = vpop.f32.mrf.mxu0
    %368 = vmatprep.mubr.f32.mxu0 0.0
    %369 = vmatmul.mubr.f32.gmra.mxu0 %v265
    %v370 = vpop.f32.mrf.mxu0
    %v371 = vadd.f32 %v287, %v370
    %v372 = vpop.f32.mrf.mxu0
    %373 = vdwg.mxu0
    %v374 = vmax.f32 %v356, 0.0
    %v375 = vmax.f32 %v361, 0.0
    %v376 = vmax.f32 %v366, 0.0
    %v377 = vmax.f32 %v371, 0.0
    %v378 = vld [vmem:[#allocation2] sm:$0x3]
    %v379 = vadd.f32 %v374, %v375
    %v380 = vrot.slane %v379, 4
    %v381 = vadd.f32 %v379, %v380
    %v382 = vrot.slane %v381, 2
    %v383 = vadd.f32 %v381, %v382
    %v384 = vrot.slane %v383, 1
    %v385 = vadd.f32 %v383, %v384
    %v386 = vadd.f32 %v376, %v377
    %v387 = vrot.slane %v386, 4
    %v388 = vadd.f32 %v386, %v387
    %v389 = vrot.slane %v388, 2
    %v390 = vadd.f32 %v388, %v389
    %v391 = vrot.slane %v390, 1
    %v392 = vadd.f32 %v390, %v391
    %vm395 = vcmask 1041409
    %v396 = vsel %vm395, %v392, %v385
    %v398 = vadd.f32 %v378, %v396
    %399 = vst [vmem:[#allocation2] sm:$0x3] %v398
    // Predicated region
    $region42: #{qpnet_forward_pallas.1} parent=1 // pred_check
      %p400 = pneg %p33
    $region43: #{qpnet_forward_pallas.1} parent=1 // pred_check_branch
      %402 = sbr.rel (%p400) target = $region45
    $region44: #{qpnet_forward_pallas.1} parent=1 // pred_region
      %v403 = vld [vmem:[%s7] sm:$0xff]
      %v404 = vld [vmem:[%s7 + $0x8] sm:$0xff]
      %v405 = vld [vmem:[%s7 + $0x10] sm:$0xff]
      %v406 = vld [vmem:[%s7 + $0x18] sm:$0xff]
      %v407 = vld [vmem:[%s7 + $0x20] sm:$0xff]
      %v408 = vld [vmem:[%s7 + $0x28] sm:$0xff]
      %v409 = vld [vmem:[%s7 + $0x30] sm:$0xff]
      %v410 = vld [vmem:[%s7 + $0x38] sm:$0xff]
      %v411 = vld [vmem:[%s7 + $0x40] sm:$0xff]
      %v412 = vld [vmem:[%s7 + $0x48] sm:$0xff]
      %v413 = vld [vmem:[%s7 + $0x50] sm:$0xff]
      %v414 = vld [vmem:[%s7 + $0x58] sm:$0xff]
      %v415 = vld [vmem:[%s7 + $0x60] sm:$0xff]
      %v416 = vld [vmem:[%s7 + $0x68] sm:$0xff]
      %v417 = vld [vmem:[%s7 + $0x70] sm:$0xff]
      %v418 = vld [vmem:[%s7 + $0x78] sm:$0xff]
      %v419 = vld [vmem:[%s8] sm:$0x1]
      %v420 = vld [vmem:[#allocation2] sm:$0x3]
      %v421 = vmul.f32 %v420, 0.0625
      %v423 = vlaneseq
      %v424 = vshrl.u32 %v423, 7
      %v425 = vsub.s32 0, %v424
      %v426 = vrot.slane %v419, %v425
      %428 = vmatprep.subr.mxu0 0.0
      %429 = vmatpush1.msra.mxu0 %v418
      %430 = vmatprep.subr.mxu0 0.0
      %431 = vmatpush1.msra.mxu0 %v417
      %432 = vmatprep.subr.mxu0 0.0
      %433 = vmatpush1.msra.mxu0 %v416
      %434 = vmatprep.subr.mxu0 0.0
      %435 = vmatpush1.msra.mxu0 %v415
      %436 = vmatprep.subr.mxu0 0.0
      %437 = vmatpush1.msra.mxu0 %v414
      %438 = vmatprep.subr.mxu0 0.0
      %439 = vmatpush1.msra.mxu0 %v413
      %440 = vmatprep.subr.mxu0 0.0
      %441 = vmatpush1.msra.mxu0 %v412
      %442 = vmatprep.subr.mxu0 0.0
      %443 = vmatpush1.msra.mxu0 %v411
      %444 = vmatprep.subr.mxu0 0.0
      %445 = vmatpush1.msra.mxu0 %v410
      %446 = vmatprep.subr.mxu0 0.0
      %447 = vmatpush1.msra.mxu0 %v409
      %448 = vmatprep.subr.mxu0 0.0
      %449 = vmatpush1.msra.mxu0 %v408
      %450 = vmatprep.subr.mxu0 0.0
      %451 = vmatpush1.msra.mxu0 %v407
      %452 = vmatprep.subr.mxu0 0.0
      %453 = vmatpush1.msra.mxu0 %v406
      %454 = vmatprep.subr.mxu0 0.0
      %455 = vmatpush1.msra.mxu0 %v405
      %456 = vmatprep.subr.mxu0 0.0
      %457 = vmatpush1.msra.mxu0 %v404
      %458 = vmatprep.subr.mxu0 0.0
      %459 = vmatpush1.msra.mxu0 %v403
      %460 = vmatprep.subr.mxu0 0.0
      %461 = vmatpush2.msra.mxu0 0.0
      %462 = vmatprep.subr.mxu0 0.0
      %463 = vmatpush2.msra.mxu0 0.0
      %464 = vmatprep.subr.mxu0 0.0
      %465 = vmatpush2.msra.mxu0 0.0
      %466 = vmatprep.subr.mxu0 0.0
      %467 = vmatpush2.msra.mxu0 0.0
      %468 = vmatprep.subr.mxu0 0.0
      %469 = vmatpush2.msra.mxu0 0.0
      %470 = vmatprep.subr.mxu0 0.0
      %471 = vmatpush2.msra.mxu0 0.0
      %472 = vmatprep.subr.mxu0 0.0
      %473 = vmatpush2.msra.mxu0 0.0
      %474 = vmatprep.subr.mxu0 0.0
      %475 = vmatpush2.msra.mxu0 0.0
      %476 = vmatprep.subr.mxu0 0.0
      %477 = vmatpush2.msra.mxu0 0.0
      %478 = vmatprep.subr.mxu0 0.0
      %479 = vmatpush2.msra.mxu0 0.0
      %480 = vmatprep.subr.mxu0 0.0
      %481 = vmatpush2.msra.mxu0 0.0
      %482 = vmatprep.subr.mxu0 0.0
      %483 = vmatpush2.msra.mxu0 0.0
      %484 = vmatprep.subr.mxu0 0.0
      %485 = vmatpush2.msra.mxu0 0.0
      %486 = vmatprep.subr.mxu0 0.0
      %487 = vmatpush2.msra.mxu0 0.0
      %488 = vmatprep.subr.mxu0 0.0
      %489 = vmatpush2.msra.mxu0 0.0
      %490 = vmatprep.subr.mxu0 0.0
      %491 = vmatpush2.msra.mxu0 0.0
      %492 = vmatprep.mubr.f32.mxu0 0.0
      %493 = vmatmul.mubr.f32.gmra.mxu0 %v421
      %v494 = vpop.f32.mrf.mxu0
      %v495 = vadd.f32 %v426, %v494
      %v496 = vpop.f32.mrf.mxu0
      %497 = vdwg.mxu0
      %v500 = vunpack.c.l.s4 1966171168
      %v501 = vunpack.c.0.s8 %v500
      %v502 = vlaneseq
      %v503 = vshrl.u32 %v502, 7
      %v504 = vsub.s32 %v501, %v503
      %v505 = vrot.slane %v495, %v504
      %v506 = vcombine.high %v505, %v505
      %v508 = vunpack.c.l.s4 1966171168
      %v509 = vunpack.c.0.s8 %v508
      %v510 = vlaneseq
      %v511 = vshrl.u32 %v510, 7
      %v512 = vsub.s32 %v509, %v511
      %v513 = vrot.slane %v505, %v512
      %v515 = vunpack.c.l.s4 1966171168
      %v516 = vunpack.c.0.s8 %v515
      %v517 = vlaneseq
      %v518 = vshrl.u32 %v517, 7
      %v519 = vsub.s32 %v516, %v518
      %v520 = vrot.slane %v506, %v519
      %523 = vst [vmem:[#allocation3] sm:$0x1] %v513
      %524 = vst [vmem:[#allocation3 + $0x1] sm:$0x1] %v520
    $region45: #{qpnet_forward_pallas.1} parent=1 // pred_fallthru
      _
    // Predicated region
    $region46: #{qpnet_forward_pallas.1} parent=1 // pred_check
      _
    $region47: #{qpnet_forward_pallas.1} parent=1 // pred_check_branch
      %526 = sbr.rel (0) target = $region49
    $region48: #{qpnet_forward_pallas.1} parent=1 // pred_region
      %s528 = ssub.s32 32, 32
      %529 = vsyncadd [#allocation4], %s528
      %s530 = sshll.u32 [#allocation3], 4
      %s531 = int_to_ptr.vmem [resolvable:$true] %s530
      %536 = dma.vmem_to_hbm [thread:$0]  %s531, 32, %s9, [#allocation4], 16, 16, 1
    $region49: #{qpnet_forward_pallas.1} parent=1 // pred_fallthru
      _
    // Predicated region
    $region50: #{qpnet_forward_pallas.1} parent=1 // pred_check
      _
    $region51: #{qpnet_forward_pallas.1} parent=1 // pred_check_branch
      %538 = sbr.rel (0) target = $region53
    $region52: #{qpnet_forward_pallas.1} parent=1 // pred_region
      %539 = dma.done [#allocation4], 32
    $region53: #{qpnet_forward_pallas.1} parent=1 // pred_fallthru
      _
    %540 = vsyncpa [#allocation4], 1

</llo_original>
